<compile_context>
chip_gen: v7x
topology: tpu7x:2x2x1
jax: 0.10.0
libtpu: 0.0.40
codegen_flags: <defaults>
</compile_context>

<pallas_src>
import jax
import jax.numpy as jnp
from jax.experimental import pallas as pl
from jax.experimental.pallas import tpu as pltpu


_LN_EPS = 1e-5
# Raise the scoped VMEM limit (default 16 MiB on v5e, 32 MiB on v6e/v7x) so
# 512-row tiles + the resident weight / aux table fit without spilling.  Kept
# at 64 MiB so it also stays within v7x's 64 MiB physical VMEM per TensorCore.
_VMEM_LIMIT_BYTES = 64 * 1024 * 1024


# ----------------------------------------------------------------------------
# In-kernel helpers
# ----------------------------------------------------------------------------
def _two_hot(pos_ref, typ_ref, n_aux, dtype):
    """(tm, n_aux) matrix with a 1 at pos_id and a 1 at max_seq + type_id."""
    tm = pos_ref.shape[0]
    iota = jax.lax.broadcasted_iota(jnp.int32, (tm, n_aux), 1)
    hit = jnp.logical_or(iota == pos_ref[...], iota == typ_ref[...])
    return hit.astype(dtype)


def _layernorm_f32(y, g_ref, beta_ref, out_dtype):
    """LayerNorm over the last axis in f32 (eps=1e-5, biased variance)."""
    mu = jnp.mean(y, axis=-1, keepdims=True)
    var = jnp.mean(jnp.square(y - mu), axis=-1, keepdims=True)
    y = (y - mu) * jax.lax.rsqrt(var + _LN_EPS)
    return (y * g_ref[...].astype(jnp.float32)
            + beta_ref[...].astype(jnp.float32)).astype(out_dtype)


# ----------------------------------------------------------------------------
# Kernel: embedding-sum + dense projection + LayerNorm (has_dense == True)
# ----------------------------------------------------------------------------
def _emb_dense_ln_kernel(pos_ref, typ_ref, xw_ref, aux_ref, w_ref, b_ref,
                         g_ref, beta_ref, o_ref):
    aux = aux_ref[...]                                   # resident (A, E)
    two_hot = _two_hot(pos_ref, typ_ref, aux.shape[0], aux.dtype)
    # word row + position row + token-type row, f32 accumulation.
    x = xw_ref[...].astype(jnp.float32) + jnp.dot(
        two_hot, aux, preferred_element_type=jnp.float32)
    # Dense projection on the MXU (weight block is grid-invariant -> resident).
    y = jnp.dot(x.astype(w_ref.dtype), w_ref[...],
                preferred_element_type=jnp.float32)
    y = y + b_ref[...].astype(jnp.float32)
    o_ref[...] = _layernorm_f32(y, g_ref, beta_ref, o_ref.dtype)


# ----------------------------------------------------------------------------
# Kernel: embedding-sum + LayerNorm only (has_dense == False fast path)
# ----------------------------------------------------------------------------
def _emb_ln_kernel(pos_ref, typ_ref, xw_ref, aux_ref, g_ref, beta_ref, o_ref):
    aux = aux_ref[...]
    two_hot = _two_hot(pos_ref, typ_ref, aux.shape[0], aux.dtype)
    y = xw_ref[...].astype(jnp.float32) + jnp.dot(
        two_hot, aux, preferred_element_type=jnp.float32)
    o_ref[...] = _layernorm_f32(y, g_ref, beta_ref, o_ref.dtype)


# ----------------------------------------------------------------------------
# Wrapper-side tiling helpers
# ----------------------------------------------------------------------------
def _round_up(x, m):
    return (x + m - 1) // m * m


def _sublane(dtype):
    """Sublane granule for a dtype: 8 (f32), 16 (bf16/f16), 32 (int8/fp8)."""
    return max(8, 32 // jnp.dtype(dtype).itemsize)


def _pick_tm(n_tok, tm, *dtypes):
    """Round tm to the strictest sublane granule; clamp to the token count."""
    g = max(_sublane(d) for d in dtypes)
    tm = max(g, (tm // g) * g)
    return min(tm, _round_up(n_tok, g))


def _compiler_params():
    return pltpu.CompilerParams(
        dimension_semantics=("parallel",),        # v7x: 2 TCs split the tokens
        vmem_limit_bytes=_VMEM_LIMIT_BYTES)


def _fused_embed_dense_ln(pos_idx, typ_idx, x_word, aux_emb, w, b, gamma, beta,
                          *, tm, out_dtype):
    n_tok, emb_dim = x_word.shape
    dim = w.shape[1]
    n_aux = aux_emb.shape[0]
    tm = _pick_tm(n_tok, tm, x_word.dtype, out_dtype)
    return pl.pallas_call(
        _emb_dense_ln_kernel,
        out_shape=jax.ShapeDtypeStruct((n_tok, dim), out_dtype),
        grid=(pl.cdiv(n_tok, tm),),               # trailing partial block masked
        in_specs=[
            pl.BlockSpec((tm, 1), lambda i: (i, 0)),           # position ids
            pl.BlockSpec((tm, 1), lambda i: (i, 0)),           # offset type ids
            pl.BlockSpec((tm, emb_dim), lambda i: (i, 0)),     # word-gather rows
            pl.BlockSpec((n_aux, emb_dim), lambda i: (0, 0)),  # resident aux table
            pl.BlockSpec((emb_dim, dim), lambda i: (0, 0)),    # resident weight
            pl.BlockSpec((1, dim), lambda i: (0, 0)),          # bias (f32)
            pl.BlockSpec((1, dim), lambda i: (0, 0)),          # gamma (f32)
            pl.BlockSpec((1, dim), lambda i: (0, 0)),          # beta (f32)
        ],
        out_specs=pl.BlockSpec((tm, dim), lambda i: (i, 0)),
        compiler_params=_compiler_params(),
    )(pos_idx, typ_idx, x_word, aux_emb, w, b, gamma, beta)


def _fused_embed_ln(pos_idx, typ_idx, x_word, aux_emb, gamma, beta,
                    *, tm, out_dtype):
    n_tok, dim = x_word.shape
    n_aux = aux_emb.shape[0]
    tm = _pick_tm(n_tok, tm, x_word.dtype, out_dtype)
    return pl.pallas_call(
        _emb_ln_kernel,
        out_shape=jax.ShapeDtypeStruct((n_tok, dim), out_dtype),
        grid=(pl.cdiv(n_tok, tm),),
        in_specs=[
            pl.BlockSpec((tm, 1), lambda i: (i, 0)),
            pl.BlockSpec((tm, 1), lambda i: (i, 0)),
            pl.BlockSpec((tm, dim), lambda i: (i, 0)),
            pl.BlockSpec((n_aux, dim), lambda i: (0, 0)),
            pl.BlockSpec((1, dim), lambda i: (0, 0)),
            pl.BlockSpec((1, dim), lambda i: (0, 0)),
        ],
        out_specs=pl.BlockSpec((tm, dim), lambda i: (i, 0)),
        compiler_params=_compiler_params(),
    )(pos_idx, typ_idx, x_word, aux_emb, gamma, beta)


# ----------------------------------------------------------------------------
# Module wrapper: mirrors Embeddings.forward.
# ----------------------------------------------------------------------------
def embeddings_forward(params, input_ids, position_ids, type_ids, *,
                       tm=512, compute_dtype=None, out_dtype=None):
    batch, seq = input_ids.shape
    word_emb = params["word_emb"]
    pos_emb = params["pos_emb"]
    type_emb = params["type_emb"]
    max_seq, emb_dim = pos_emb.shape
    n_type = type_emb.shape[0]

    cdtype = jnp.dtype(compute_dtype) if compute_dtype is not None else word_emb.dtype
    odtype = jnp.dtype(out_dtype) if out_dtype is not None else cdtype

    # Clamp ids so a bad index can never become an out-of-bounds lookup.
    ids = jnp.clip(input_ids.reshape(-1).astype(jnp.int32), 0, word_emb.shape[0] - 1)
    pos = jnp.clip(position_ids.reshape(-1).astype(jnp.int32), 0, max_seq - 1)
    typ = jnp.clip(type_ids.reshape(-1).astype(jnp.int32), 0, n_type - 1)

    # The vocab-sized word gather stays in XLA (table far too big for VMEM
    # residency); its result is the kernel's streamed activation, cast to the
    # streaming dtype so the HBM round trip is as small as possible.
    x_word = jnp.take(word_emb, ids, axis=0).astype(cdtype)            # (N, E)

    # Position + token-type tables are tiny -> concatenate into one aux table,
    # kept resident in VMEM; the kernel adds both rows per token with a single
    # two-hot MXU matmul driven by the streamed int32 ids.
    aux_emb = jnp.concatenate([pos_emb, type_emb], axis=0).astype(cdtype)
    pos_idx = pos[:, None]                                             # (N, 1)
    typ_idx = (typ + max_seq)[:, None]                                 # (N, 1)

    gamma, beta = params["ln_gamma"], params["ln_beta"]
    if params.get("dense_w") is not None:
        w = params["dense_w"].astype(cdtype)
        out = _fused_embed_dense_ln(pos_idx, typ_idx, x_word, aux_emb, w,
                                    params["dense_b"], gamma, beta,
                                    tm=tm, out_dtype=odtype)
        dim = w.shape[1]
    else:
        out = _fused_embed_ln(pos_idx, typ_idx, x_word, aux_emb, gamma, beta,
                              tm=tm, out_dtype=odtype)
        dim = emb_dim

    # TODO(synk): dropout is inference-mode identity; training-mode dropout
    # would use pltpu.prng_seed / pltpu.prng_random_bits inside the kernels.
    return out.reshape(batch, seq, dim)


# ----------------------------------------------------------------------------
# Pure-JAX reference (matches the PyTorch module's forward, f32).
# ----------------------------------------------------------------------------
def _reference_forward(params, input_ids, position_ids, type_ids):
    x = (params["word_emb"][input_ids]
         + params["pos_emb"][position_ids]
         + params["type_emb"][type_ids])
    if params.get("dense_w") is not None:
        x = x @ params["dense_w"] + params["dense_b"][0]
    mu = jnp.mean(x, axis=-1, keepdims=True)
    var = jnp.mean(jnp.square(x - mu), axis=-1, keepdims=True)
    x = (x - mu) * jax.lax.rsqrt(var + _LN_EPS)
    return x * params["ln_gamma"][0] + params["ln_beta"][0]


if __name__ == "__main__":
    key = jax.random.PRNGKey(0)

    def make_params(k, vocab, max_seq, n_type, emb_dim, dim):
        ks = jax.random.split(k, 7)
        has_dense = emb_dim != dim
        return {
            "word_emb": 0.02 * jax.random.normal(ks[0], (vocab, emb_dim), jnp.float32),
            "pos_emb": 0.02 * jax.random.normal(ks[1], (max_seq, emb_dim), jnp.float32),
            "type_emb": 0.02 * jax.random.normal(ks[2], (n_type, emb_dim), jnp.float32),
            # nn.Linear(embedding_dim, dim): stored pre-transposed as (E, D).
            "dense_w": ((1.0 / jnp.sqrt(emb_dim))
                        * jax.random.normal(ks[3], (emb_dim, dim), jnp.float32)
                        if has_dense else None),
            "dense_b": (0.01 * jax.random.normal(ks[4], (1, dim), jnp.float32)
                        if has_dense else None),
            "ln_gamma": 1.0 + 0.1 * jax.random.normal(ks[5], (1, dim), jnp.float32),
            "ln_beta": 0.1 * jax.random.normal(ks[6], (1, dim), jnp.float32),
        }

    k1, k2, k_ids, k_typ = jax.random.split(key, 4)

    batch, seq = 2, 24  # N = 48
    vocab, max_seq, n_type = 512, 64, 2

    input_ids = jax.random.randint(k_ids, (batch, seq), 0, vocab, dtype=jnp.int32)
    position_ids = jnp.broadcast_to(
        jnp.arange(seq, dtype=jnp.int32)[None, :], (batch, seq))
    type_ids = jax.random.randint(k_typ, (batch, seq), 0, n_type, dtype=jnp.int32)

    # Config A: embedding_dim != dim -> fused embed-sum + dense + LayerNorm (f32).
    paramsA = make_params(k1, vocab, max_seq, n_type, emb_dim=128, dim=256)
    outA = jax.block_until_ready(
        embeddings_forward(paramsA, input_ids, position_ids, type_ids))
    refA = _reference_forward(paramsA, input_ids, position_ids, type_ids)
    assert outA.shape == (batch, seq, 256)
    assert jnp.allclose(outA, refA, atol=2e-4, rtol=2e-4), \
        float(jnp.max(jnp.abs(outA - refA)))

    # Config B: embedding_dim == dim -> fused embed-sum + LayerNorm fast path.
    # tm=32 forces a trailing partial block (48 = 32 + 16) to exercise masking.
    paramsB = make_params(k2, vocab, max_seq, n_type, emb_dim=128, dim=128)
    outB = jax.block_until_ready(
        embeddings_forward(paramsB, input_ids, position_ids, type_ids, tm=32))
    refB = _reference_forward(paramsB, input_ids, position_ids, type_ids)
    assert outB.shape == (batch, seq, 128)
    assert jnp.allclose(outB, refB, atol=2e-4, rtol=2e-4), \
        float(jnp.max(jnp.abs(outB - refB)))

    # Config C: dense path with bf16 streaming / bf16 output (f32 accumulation
    # and LN stats inside the kernel); looser tolerance vs the f32 reference.
    outC = jax.block_until_ready(
        embeddings_forward(paramsA, input_ids, position_ids, type_ids,
                           compute_dtype=jnp.bfloat16, out_dtype=jnp.bfloat16))
    assert outC.dtype == jnp.bfloat16 and outC.shape == (batch, seq, 256)
    assert jnp.allclose(outC.astype(jnp.float32), refA, atol=1e-1, rtol=1e-1), \
        float(jnp.max(jnp.abs(outC.astype(jnp.float32) - refA)))

    print("KERNEL_OK")
</pallas_src>

<mosaic_0001>
module attributes {stable_mosaic.version = 11 : i64} {
  func.func @_emb_dense_ln_kernel(%arg0: i32, %arg1: memref<48x1xi32, #tpu.memory_space<vmem>>, %arg2: memref<48x1xi32, #tpu.memory_space<vmem>>, %arg3: memref<48x128xf32, #tpu.memory_space<vmem>>, %arg4: memref<66x128xf32, #tpu.memory_space<vmem>>, %arg5: memref<128x256xf32, #tpu.memory_space<vmem>>, %arg6: memref<1x256xf32, #tpu.memory_space<vmem>>, %arg7: memref<1x256xf32, #tpu.memory_space<vmem>>, %arg8: memref<1x256xf32, #tpu.memory_space<vmem>>, %arg9: memref<48x256xf32, #tpu.memory_space<vmem>>) attributes {dimension_semantics = [#tpu.dimension_semantics<parallel>], iteration_bounds = array<i64: 1>, scalar_prefetch = 0 : i64, scratch_operands = 0 : i64, tpu.core_type = #tpu.core_type<tc>, window_params = [{transform_indices = @transform_0, window_bounds = array<i64: 48, 1>}, {transform_indices = @transform_1, window_bounds = array<i64: 48, 1>}, {transform_indices = @transform_2, window_bounds = array<i64: 48, 128>}, {pipeline_mode = #tpu.pipeline_mode<synchronous>, transform_indices = @transform_3, window_bounds = array<i64: 66, 128>}, {pipeline_mode = #tpu.pipeline_mode<synchronous>, transform_indices = @transform_4, window_bounds = array<i64: 128, 256>}, {pipeline_mode = #tpu.pipeline_mode<synchronous>, transform_indices = @transform_5, window_bounds = array<i64: 1, 256>}, {pipeline_mode = #tpu.pipeline_mode<synchronous>, transform_indices = @transform_6, window_bounds = array<i64: 1, 256>}, {pipeline_mode = #tpu.pipeline_mode<synchronous>, transform_indices = @transform_7, window_bounds = array<i64: 1, 256>}, {transform_indices = @transform_8, window_bounds = array<i64: 48, 256>}]} {
    %c0 = arith.constant 0 : index
    %c0_0 = arith.constant 0 : index
    %0 = vector.load %arg4[%c0, %c0_0] : memref<66x128xf32, #tpu.memory_space<vmem>>, vector<66x128xf32>
    %1 = tpu.iota {dimensions = array<i32: 1>} : vector<48x66xi32>
    %c0_1 = arith.constant 0 : index
    %c0_2 = arith.constant 0 : index
    %2 = vector.load %arg1[%c0_1, %c0_2] : memref<48x1xi32, #tpu.memory_space<vmem>>, vector<48x1xi32>
    %3 = vector.broadcast %2 : vector<48x1xi32> to vector<48x66xi32>
    %4 = arith.cmpi eq, %1, %3 : vector<48x66xi32>
    %c0_3 = arith.constant 0 : index
    %c0_4 = arith.constant 0 : index
    %5 = vector.load %arg2[%c0_3, %c0_4] : memref<48x1xi32, #tpu.memory_space<vmem>>, vector<48x1xi32>
    %6 = vector.broadcast %5 : vector<48x1xi32> to vector<48x66xi32>
    %7 = arith.cmpi eq, %1, %6 : vector<48x66xi32>
    %8 = arith.ori %4, %7 : vector<48x66xi1>
    %9 = arith.extui %8 : vector<48x66xi1> to vector<48x66xi32>
    %10 = arith.sitofp %9 : vector<48x66xi32> to vector<48x66xf32>
    %c0_5 = arith.constant 0 : index
    %c0_6 = arith.constant 0 : index
    %11 = vector.load %arg3[%c0_5, %c0_6] : memref<48x128xf32, #tpu.memory_space<vmem>>, vector<48x128xf32>
    %cst = arith.constant dense<0.000000e+00> : vector<48x128xf32>
    %12 = tpu.matmul %10, %0, %cst {dimension_numbers = #tpu.dot_dimension_numbers<[1], [0], [0], [1], [0, 0, 1, 1], [], []>} : vector<48x66xf32>, vector<66x128xf32>, vector<48x128xf32> -> vector<48x128xf32>
    %13 = arith.addf %11, %12 : vector<48x128xf32>
    %c0_7 = arith.constant 0 : index
    %c0_8 = arith.constant 0 : index
    %14 = vector.load %arg5[%c0_7, %c0_8] : memref<128x256xf32, #tpu.memory_space<vmem>>, vector<128x256xf32>
    %cst_9 = arith.constant dense<0.000000e+00> : vector<48x256xf32>
    %15 = tpu.matmul %13, %14, %cst_9 {dimension_numbers = #tpu.dot_dimension_numbers<[1], [0], [0], [1], [0, 0, 1, 1], [], []>} : vector<48x128xf32>, vector<128x256xf32>, vector<48x256xf32> -> vector<48x256xf32>
    %c0_10 = arith.constant 0 : index
    %c0_11 = arith.constant 0 : index
    %16 = vector.load %arg6[%c0_10, %c0_11] : memref<1x256xf32, #tpu.memory_space<vmem>>, vector<1x256xf32>
    %17 = vector.broadcast %16 : vector<1x256xf32> to vector<48x256xf32>
    %18 = arith.addf %15, %17 : vector<48x256xf32>
    %cst_12 = arith.constant dense<0.000000e+00> : vector<48xf32>
    %19 = vector.multi_reduction <add>, %18, %cst_12 [1] : vector<48x256xf32> to vector<48xf32>
    %20 = vector.shape_cast %19 : vector<48xf32> to vector<48x1xf32>
    %cst_13 = arith.constant 2.560000e+02 : f32
    %21 = vector.broadcast %cst_13 : f32 to vector<48x1xf32>
    %22 = arith.divf %20, %21 : vector<48x1xf32>
    %23 = vector.broadcast %22 : vector<48x1xf32> to vector<48x256xf32>
    %24 = arith.subf %18, %23 : vector<48x256xf32>
    %25 = arith.mulf %24, %24 : vector<48x256xf32>
    %cst_14 = arith.constant dense<0.000000e+00> : vector<48xf32>
    %26 = vector.multi_reduction <add>, %25, %cst_14 [1] : vector<48x256xf32> to vector<48xf32>
    %27 = vector.shape_cast %26 : vector<48xf32> to vector<48x1xf32>
    %cst_15 = arith.constant 2.560000e+02 : f32
    %28 = vector.broadcast %cst_15 : f32 to vector<48x1xf32>
    %29 = arith.divf %27, %28 : vector<48x1xf32>
    %30 = vector.broadcast %22 : vector<48x1xf32> to vector<48x256xf32>
    %31 = arith.subf %18, %30 : vector<48x256xf32>
    %cst_16 = arith.constant 9.99999974E-6 : f32
    %32 = vector.broadcast %cst_16 : f32 to vector<48x1xf32>
    %33 = arith.addf %29, %32 : vector<48x1xf32>
    %34 = math.rsqrt %33 : vector<48x1xf32>
    %35 = vector.broadcast %34 : vector<48x1xf32> to vector<48x256xf32>
    %36 = arith.mulf %31, %35 : vector<48x256xf32>
    %c0_17 = arith.constant 0 : index
    %c0_18 = arith.constant 0 : index
    %37 = vector.load %arg7[%c0_17, %c0_18] : memref<1x256xf32, #tpu.memory_space<vmem>>, vector<1x256xf32>
    %38 = vector.broadcast %37 : vector<1x256xf32> to vector<48x256xf32>
    %39 = arith.mulf %36, %38 : vector<48x256xf32>
    %c0_19 = arith.constant 0 : index
    %c0_20 = arith.constant 0 : index
    %40 = vector.load %arg8[%c0_19, %c0_20] : memref<1x256xf32, #tpu.memory_space<vmem>>, vector<1x256xf32>
    %41 = vector.broadcast %40 : vector<1x256xf32> to vector<48x256xf32>
    %42 = arith.addf %39, %41 : vector<48x256xf32>
    %c0_21 = arith.constant 0 : index
    %c0_22 = arith.constant 0 : index
    %43 = vector.load %arg9[%c0_21, %c0_22] : memref<48x256xf32, #tpu.memory_space<vmem>>, vector<48x256xf32>
    tpu.vector_store %arg9[%c0_21, %c0_22], %42 {strides = array<i32>} : memref<48x256xf32, #tpu.memory_space<vmem>>, vector<48x256xf32>,
    return
  }
  func.func @transform_0(%arg0: i32) -> (i32, i32) {
    %c0_i32 = arith.constant 0 : i32
    %c0_i32_0 = arith.constant 0 : i32
    return %arg0, %c0_i32 : i32, i32
  }
  func.func @transform_1(%arg0: i32) -> (i32, i32) {
    %c0_i32 = arith.constant 0 : i32
    %c0_i32_0 = arith.constant 0 : i32
    return %arg0, %c0_i32 : i32, i32
  }
  func.func @transform_2(%arg0: i32) -> (i32, i32) {
    %c0_i32 = arith.constant 0 : i32
    %c0_i32_0 = arith.constant 0 : i32
    return %arg0, %c0_i32 : i32, i32
  }
  func.func @transform_3(%arg0: i32) -> (i32, i32) {
    %c0_i32 = arith.constant 0 : i32
    %c0_i32_0 = arith.constant 0 : i32
    %c0_i32_1 = arith.constant 0 : i32
    return %c0_i32, %c0_i32_0 : i32, i32
  }
  func.func @transform_4(%arg0: i32) -> (i32, i32) {
    %c0_i32 = arith.constant 0 : i32
    %c0_i32_0 = arith.constant 0 : i32
    %c0_i32_1 = arith.constant 0 : i32
    return %c0_i32, %c0_i32_0 : i32, i32
  }
  func.func @transform_5(%arg0: i32) -> (i32, i32) {
    %c0_i32 = arith.constant 0 : i32
    %c0_i32_0 = arith.constant 0 : i32
    %c0_i32_1 = arith.constant 0 : i32
    return %c0_i32, %c0_i32_0 : i32, i32
  }
  func.func @transform_6(%arg0: i32) -> (i32, i32) {
    %c0_i32 = arith.constant 0 : i32
    %c0_i32_0 = arith.constant 0 : i32
    %c0_i32_1 = arith.constant 0 : i32
    return %c0_i32, %c0_i32_0 : i32, i32
  }
  func.func @transform_7(%arg0: i32) -> (i32, i32) {
    %c0_i32 = arith.constant 0 : i32
    %c0_i32_0 = arith.constant 0 : i32
    %c0_i32_1 = arith.constant 0 : i32
    return %c0_i32, %c0_i32_0 : i32, i32
  }
  func.func @transform_8(%arg0: i32) -> (i32, i32) {
    %c0_i32 = arith.constant 0 : i32
    %c0_i32_0 = arith.constant 0 : i32
    return %arg0, %c0_i32 : i32, i32
  }
}

</mosaic_0001>

<llo_original>
// kernel: tpu_custom_call.1
$region0: #{tpu_custom_call.1}
  #allocation0 [shape = 'u32[]', space=smem, size = 0x4, offset = 0x4, fixed_abs, tag = 'smem constant byte address 0x4 - core index']
  #allocation1 [shape = 'u32[144,128]{1,0:T(1,128)}', space=vmem, size = 0x12000, scoped, tag = 'internal scratch']
  %s0 = inlined_call_operand.hbm [shape: s32[48,1], index: 0, kind: input, shape index: {}]
  %s1 = inlined_call_operand.hbm [shape: s32[48,1], index: 1, kind: input, shape index: {}]
  %s2 = inlined_call_operand.hbm [shape: f32[48,128], index: 2, kind: input, shape index: {}]
  %s3 = inlined_call_operand.hbm [shape: f32[66,128], index: 3, kind: input, shape index: {}]
  %s4 = inlined_call_operand.hbm [shape: f32[128,256], index: 4, kind: input, shape index: {}]
  %s5 = inlined_call_operand.hbm [shape: f32[1,256], index: 5, kind: input, shape index: {}]
  %s6 = inlined_call_operand.hbm [shape: f32[1,256], index: 6, kind: input, shape index: {}]
  %s7 = inlined_call_operand.hbm [shape: f32[1,256], index: 7, kind: input, shape index: {}]
  %s8 = inlined_call_operand.hbm [shape: f32[48,256], index: 8, kind: output, shape index: {}]
  %s9 = sld [smem:[#allocation0]]
  $region74: #{tpu_custom_call.1} parent=0
    _
  %s11 = ssub.s32 1, %s9
  %s12 = scalar_select 0, %s11, %s9
  $region1: #{tpu_custom_call.1} parent=0
    #allocation2 [shape = 'u8[24576]{0}', space=vmem, size = 0x6000, scoped, tag = 'input window, operand 0, single buffered']
    #allocation3 [shape = 's32[1]{0}', space=sflag, size = 0x4, scoped, tag = 'scoped memory for tpu_custom_call.1']
    #allocation4 [shape = 's32[1]{0}', space=sflag, size = 0x4, scoped, tag = 'scoped memory for tpu_custom_call.1']
    #allocation5 [shape = 'u8[24576]{0}', space=vmem, size = 0x6000, scoped, tag = 'input window, operand 1, single buffered']
    #allocation6 [shape = 's32[1]{0}', space=sflag, size = 0x4, scoped, tag = 'scoped memory for tpu_custom_call.1']
    #allocation7 [shape = 'u8[24576]{0}', space=vmem, size = 0x6000, scoped, tag = 'input window, operand 2, single buffered']
    #allocation8 [shape = 'u8[36864]{0}', space=vmem, size = 0x9000, scoped, tag = 'input window, operand 3, single buffered']
    #allocation9 [shape = 's32[1]{0}', space=sflag, size = 0x4, scoped, tag = 'scoped memory for tpu_custom_call.1']
    #allocation10 [shape = 'u8[131072]{0}', space=vmem, size = 0x20000, scoped, tag = 'input window, operand 4, single buffered']
    #allocation11 [shape = 'u8[1024]{0}', space=vmem, size = 0x400, scoped, tag = 'input window, operand 5, single buffered']
    #allocation12 [shape = 's32[1]{0}', space=sflag, size = 0x4, scoped, tag = 'scoped memory for tpu_custom_call.1']
    #allocation13 [shape = 'u8[1024]{0}', space=vmem, size = 0x400, scoped, tag = 'input window, operand 6, single buffered']
    #allocation14 [shape = 'u8[1024]{0}', space=vmem, size = 0x400, scoped, tag = 'input window, operand 7, single buffered']
    #allocation15 [shape = 's32[1]{0}', space=sflag, size = 0x4, scoped, tag = 'scoped memory for tpu_custom_call.1']
    #allocation16 [shape = 'u8[49152]{0}', space=vmem, size = 0xc000, scoped, tag = 'output window, operand 0, single buffered']
    %13 = vsyncpa [#allocation3], 0
    %14 = vsyncpa [#allocation6], 0
    %15 = vsyncpa [#allocation9], 0
    %16 = vsyncpa [#allocation12], 0
    %17 = vsyncpa [#allocation15], 0
    %18 = vsyncpa [#allocation4], 0
    // Predicated region
    $region2: #{tpu_custom_call.1} parent=1 // pred_check
      _
    $region3: #{tpu_custom_call.1} parent=1 // pred_check_branch
      %20 = sbr.rel (0) target = $region5
    $region4: #{tpu_custom_call.1} parent=1 // pred_region
      %s22 = ssub.s32 768, 768
      %23 = vsyncadd [#allocation3], %s22
      %s24 = sshll.u32 [#allocation2], 4
      %s25 = int_to_ptr.vmem [resolvable:$true] %s24
      %30 = dma.hbm_to_vmem [thread:$0]  %s0, 768, %s25, [#allocation3], 128, 128, 8
    $region5: #{tpu_custom_call.1} parent=1 // pred_fallthru
      _
    // Predicated region
    $region6: #{tpu_custom_call.1} parent=1 // pred_check
      _
    $region7: #{tpu_custom_call.1} parent=1 // pred_check_branch
      %32 = sbr.rel (0) target = $region9
    $region8: #{tpu_custom_call.1} parent=1 // pred_region
      %s34 = ssub.s32 768, 768
      %35 = vsyncadd [#allocation6], %s34
      %s36 = sshll.u32 [#allocation5], 4
      %s37 = int_to_ptr.vmem [resolvable:$true] %s36
      %42 = dma.hbm_to_vmem [thread:$0]  %s1, 768, %s37, [#allocation6], 128, 128, 8
    $region9: #{tpu_custom_call.1} parent=1 // pred_fallthru
      _
    // Predicated region
    $region10: #{tpu_custom_call.1} parent=1 // pred_check
      _
    $region11: #{tpu_custom_call.1} parent=1 // pred_check_branch
      %44 = sbr.rel (0) target = $region13
    $region12: #{tpu_custom_call.1} parent=1 // pred_region
      %s46 = ssub.s32 768, 768
      %47 = vsyncadd [#allocation6], %s46
      %s48 = sshll.u32 [#allocation7], 4
      %s49 = int_to_ptr.vmem [resolvable:$true] %s48
      %54 = dma.hbm_to_vmem [thread:$0]  %s2, 768, %s49, [#allocation6], 128, 128, 8
    $region13: #{tpu_custom_call.1} parent=1 // pred_fallthru
      _
    // Predicated region
    $region14: #{tpu_custom_call.1} parent=1 // pred_check
      _
    $region15: #{tpu_custom_call.1} parent=1 // pred_check_branch
      %56 = sbr.rel (0) target = $region17
    $region16: #{tpu_custom_call.1} parent=1 // pred_region
      %s58 = ssub.s32 1152, 1152
      %59 = vsyncadd [#allocation9], %s58
      %s60 = sshll.u32 [#allocation8], 4
      %s61 = int_to_ptr.vmem [resolvable:$true] %s60
      %66 = dma.hbm_to_vmem [thread:$0]  %s3, 1152, %s61, [#allocation9], 128, 128, 8
    $region17: #{tpu_custom_call.1} parent=1 // pred_fallthru
      _
    // Predicated region
    $region18: #{tpu_custom_call.1} parent=1 // pred_check
      _
    $region19: #{tpu_custom_call.1} parent=1 // pred_check_branch
      %68 = sbr.rel (0) target = $region21
    $region20: #{tpu_custom_call.1} parent=1 // pred_region
      %s70 = ssub.s32 4096, 4096
      %71 = vsyncadd [#allocation9], %s70
      %s72 = sshll.u32 [#allocation10], 4
      %s73 = int_to_ptr.vmem [resolvable:$true] %s72
      %78 = dma.hbm_to_vmem [thread:$0]  %s4, 4096, %s73, [#allocation9], 256, 256, 16
    $region21: #{tpu_custom_call.1} parent=1 // pred_fallthru
      _
    // Predicated region
    $region22: #{tpu_custom_call.1} parent=1 // pred_check
      _
    $region23: #{tpu_custom_call.1} parent=1 // pred_check_branch
      %80 = sbr.rel (0) target = $region25
    $region24: #{tpu_custom_call.1} parent=1 // pred_region
      %s82 = ssub.s32 32, 32
      %83 = vsyncadd [#allocation12], %s82
      %s85 = sshll.u32 [#allocation11], 4
      %s86 = int_to_ptr.vmem [resolvable:$true] %s85
      %88 = dma.hbm_to_vmem [thread:$0]  %s5, 32, %s86, [#allocation12]
    $region25: #{tpu_custom_call.1} parent=1 // pred_fallthru
      _
    // Predicated region
    $region26: #{tpu_custom_call.1} parent=1 // pred_check
      _
    $region27: #{tpu_custom_call.1} parent=1 // pred_check_branch
      %90 = sbr.rel (0) target = $region29
    $region28: #{tpu_custom_call.1} parent=1 // pred_region
      %s92 = ssub.s32 32, 32
      %93 = vsyncadd [#allocation12], %s92
      %s95 = sshll.u32 [#allocation13], 4
      %s96 = int_to_ptr.vmem [resolvable:$true] %s95
      %98 = dma.hbm_to_vmem [thread:$0]  %s6, 32, %s96, [#allocation12]
    $region29: #{tpu_custom_call.1} parent=1 // pred_fallthru
      _
    // Predicated region
    $region30: #{tpu_custom_call.1} parent=1 // pred_check
      _
    $region31: #{tpu_custom_call.1} parent=1 // pred_check_branch
      %100 = sbr.rel (0) target = $region33
    $region32: #{tpu_custom_call.1} parent=1 // pred_region
      %s102 = ssub.s32 32, 32
      %103 = vsyncadd [#allocation15], %s102
      %s105 = sshll.u32 [#allocation14], 4
      %s106 = int_to_ptr.vmem [resolvable:$true] %s105
      %108 = dma.hbm_to_vmem [thread:$0]  %s7, 32, %s106, [#allocation15]
    $region33: #{tpu_custom_call.1} parent=1 // pred_fallthru
      _
    // Predicated region
    $region34: #{tpu_custom_call.1} parent=1 // pred_check
      _
    $region35: #{tpu_custom_call.1} parent=1 // pred_check_branch
      %110 = sbr.rel (0) target = $region37
    $region36: #{tpu_custom_call.1} parent=1 // pred_region
      %111 = dma.done [#allocation3], 768
    $region37: #{tpu_custom_call.1} parent=1 // pred_fallthru
      _
    // Predicated region
    $region38: #{tpu_custom_call.1} parent=1 // pred_check
      _
    $region39: #{tpu_custom_call.1} parent=1 // pred_check_branch
      %113 = sbr.rel (0) target = $region41
    $region40: #{tpu_custom_call.1} parent=1 // pred_region
      %114 = dma.done [#allocation6], 768
    $region41: #{tpu_custom_call.1} parent=1 // pred_fallthru
      _
    // Predicated region
    $region42: #{tpu_custom_call.1} parent=1 // pred_check
      _
    $region43: #{tpu_custom_call.1} parent=1 // pred_check_branch
      %116 = sbr.rel (0) target = $region45
    $region44: #{tpu_custom_call.1} parent=1 // pred_region
      %117 = dma.done [#allocation6], 768
    $region45: #{tpu_custom_call.1} parent=1 // pred_fallthru
      _
    // Predicated region
    $region46: #{tpu_custom_call.1} parent=1 // pred_check
      _
    $region47: #{tpu_custom_call.1} parent=1 // pred_check_branch
      %119 = sbr.rel (0) target = $region49
    $region48: #{tpu_custom_call.1} parent=1 // pred_region
      %120 = dma.done [#allocation9], 1152
    $region49: #{tpu_custom_call.1} parent=1 // pred_fallthru
      _
    // Predicated region
    $region50: #{tpu_custom_call.1} parent=1 // pred_check
      _
    $region51: #{tpu_custom_call.1} parent=1 // pred_check_branch
      %122 = sbr.rel (0) target = $region53
    $region52: #{tpu_custom_call.1} parent=1 // pred_region
      %123 = dma.done [#allocation9], 4096
    $region53: #{tpu_custom_call.1} parent=1 // pred_fallthru
      _
    // Predicated region
    $region54: #{tpu_custom_call.1} parent=1 // pred_check
      _
    $region55: #{tpu_custom_call.1} parent=1 // pred_check_branch
      %125 = sbr.rel (0) target = $region57
    $region56: #{tpu_custom_call.1} parent=1 // pred_region
      %126 = dma.done [#allocation12], 32
    $region57: #{tpu_custom_call.1} parent=1 // pred_fallthru
      _
    // Predicated region
    $region58: #{tpu_custom_call.1} parent=1 // pred_check
      _
    $region59: #{tpu_custom_call.1} parent=1 // pred_check_branch
      %128 = sbr.rel (0) target = $region61
    $region60: #{tpu_custom_call.1} parent=1 // pred_region
      %129 = dma.done [#allocation12], 32
    $region61: #{tpu_custom_call.1} parent=1 // pred_fallthru
      _
    // Predicated region
    $region62: #{tpu_custom_call.1} parent=1 // pred_check
      _
    $region63: #{tpu_custom_call.1} parent=1 // pred_check_branch
      %131 = sbr.rel (0) target = $region65
    $region64: #{tpu_custom_call.1} parent=1 // pred_region
      %132 = dma.done [#allocation15], 32
    $region65: #{tpu_custom_call.1} parent=1 // pred_fallthru
      _
    %v133 = vld [vmem:[#allocation8] sm:$0xff]
    %v134 = vld [vmem:[#allocation8 + $0x8] sm:$0xff]
    %v135 = vld [vmem:[#allocation8 + $0x10] sm:$0xff]
    %v136 = vld [vmem:[#allocation8 + $0x18] sm:$0xff]
    %v137 = vld [vmem:[#allocation8 + $0x20] sm:$0xff]
    %v138 = vld [vmem:[#allocation8 + $0x28] sm:$0xff]
    %v139 = vld [vmem:[#allocation8 + $0x30] sm:$0xff]
    %v140 = vld [vmem:[#allocation8 + $0x38] sm:$0xff]
    %v141 = vld [vmem:[#allocation8 + $0x40] sm:$0x3]
    %v142 = vlaneseq
    %v143 = vand.u32 %v142, 127
    %v144 = vld [vmem:[#allocation2] sm:$0xff]
    %v145 = vld [vmem:[#allocation2 + $0x8] sm:$0xff]
    %v146 = vld [vmem:[#allocation2 + $0x10] sm:$0xff]
    %v147 = vld [vmem:[#allocation2 + $0x18] sm:$0xff]
    %v148 = vld [vmem:[#allocation2 + $0x20] sm:$0xff]
    %v149 = vld [vmem:[#allocation2 + $0x28] sm:$0xff]
    %150 = vset.pattern.permute.xlu0 0
    %151 = vperm.xlu0 %150, %v144
    %v152 = vpop.permute.xlu0 %151
    %153 = vset.pattern.permute.xlu0 0
    %154 = vperm.xlu0 %153, %v145
    %v155 = vpop.permute.xlu0 %154
    %156 = vset.pattern.permute.xlu0 0
    %157 = vperm.xlu0 %156, %v146
    %v158 = vpop.permute.xlu0 %157
    %159 = vset.pattern.permute.xlu0 0
    %160 = vperm.xlu0 %159, %v147
    %v161 = vpop.permute.xlu0 %160
    %162 = vset.pattern.permute.xlu0 0
    %163 = vperm.xlu0 %162, %v148
    %v164 = vpop.permute.xlu0 %163
    %165 = vset.pattern.permute.xlu0 0
    %166 = vperm.xlu0 %165, %v149
    %v167 = vpop.permute.xlu0 %166
    %vm168 = vcmp.eq.s32.totalorder %v143, %v152
    %vm169 = vcmp.eq.s32.totalorder %v143, %v155
    %vm170 = vcmp.eq.s32.totalorder %v143, %v158
    %vm171 = vcmp.eq.s32.totalorder %v143, %v161
    %vm172 = vcmp.eq.s32.totalorder %v143, %v164
    %vm173 = vcmp.eq.s32.totalorder %v143, %v167
    %v174 = vld [vmem:[#allocation5] sm:$0xff]
    %v175 = vld [vmem:[#allocation5 + $0x8] sm:$0xff]
    %v176 = vld [vmem:[#allocation5 + $0x10] sm:$0xff]
    %v177 = vld [vmem:[#allocation5 + $0x18] sm:$0xff]
    %v178 = vld [vmem:[#allocation5 + $0x20] sm:$0xff]
    %v179 = vld [vmem:[#allocation5 + $0x28] sm:$0xff]
    %180 = vset.pattern.permute.xlu0 0
    %181 = vperm.xlu0 %180, %v174
    %v182 = vpop.permute.xlu0 %181
    %183 = vset.pattern.permute.xlu0 0
    %184 = vperm.xlu0 %183, %v175
    %v185 = vpop.permute.xlu0 %184
    %186 = vset.pattern.permute.xlu0 0
    %187 = vperm.xlu0 %186, %v176
    %v188 = vpop.permute.xlu0 %187
    %189 = vset.pattern.permute.xlu0 0
    %190 = vperm.xlu0 %189, %v177
    %v191 = vpop.permute.xlu0 %190
    %192 = vset.pattern.permute.xlu0 0
    %193 = vperm.xlu0 %192, %v178
    %v194 = vpop.permute.xlu0 %193
    %195 = vset.pattern.permute.xlu0 0
    %196 = vperm.xlu0 %195, %v179
    %v197 = vpop.permute.xlu0 %196
    %vm198 = vcmp.eq.s32.totalorder %v143, %v182
    %vm199 = vcmp.eq.s32.totalorder %v143, %v185
    %vm200 = vcmp.eq.s32.totalorder %v143, %v188
    %vm201 = vcmp.eq.s32.totalorder %v143, %v191
    %vm202 = vcmp.eq.s32.totalorder %v143, %v194
    %vm203 = vcmp.eq.s32.totalorder %v143, %v197
    %vm204 = vmor %vm168, %vm198
    %vm205 = vmor %vm169, %vm199
    %vm206 = vmor %vm170, %vm200
    %vm207 = vmor %vm171, %vm201
    %vm208 = vmor %vm172, %vm202
    %vm209 = vmor %vm173, %vm203
    %v210 = vsel %vm204, 1, 0
    %v211 = vsel %vm205, 1, 0
    %v212 = vsel %vm206, 1, 0
    %v213 = vsel %vm207, 1, 0
    %v214 = vsel %vm208, 1, 0
    %v215 = vsel %vm209, 1, 0
    %v216 = vcvt.s32.f32 %v210
    %v217 = vcvt.s32.f32 %v211
    %v218 = vcvt.s32.f32 %v212
    %v219 = vcvt.s32.f32 %v213
    %v220 = vcvt.s32.f32 %v214
    %v221 = vcvt.s32.f32 %v215
    %v222 = vld [vmem:[#allocation7] sm:$0xff]
    %v223 = vld [vmem:[#allocation7 + $0x8] sm:$0xff]
    %v224 = vld [vmem:[#allocation7 + $0x10] sm:$0xff]
    %v225 = vld [vmem:[#allocation7 + $0x18] sm:$0xff]
    %v226 = vld [vmem:[#allocation7 + $0x20] sm:$0xff]
    %v227 = vld [vmem:[#allocation7 + $0x28] sm:$0xff]
    %vm228 = vcmask 539648
    %v230 = vsel %vm228, %v216, 0
    %v233 = vsel %vm228, %v217, 0
    %v236 = vsel %vm228, %v218, 0
    %v239 = vsel %vm228, %v219, 0
    %v242 = vsel %vm228, %v220, 0
    %v245 = vsel %vm228, %v221, 0
    %vm247 = vcmask 1041408
    %v249 = vsel %vm247, %v141, 0
    %251 = vmatprep.subr.mxu0 0.0
    %252 = vmatpush1.msra.mxu0 %v133
    %253 = vmatprep.subr.mxu0 0.0
    %254 = vmatpush1.msra.mxu0 %v134
    %255 = vmatprep.subr.mxu0 0.0
    %256 = vmatpush1.msra.mxu0 %v135
    %257 = vmatprep.subr.mxu0 0.0
    %258 = vmatpush1.msra.mxu0 %v136
    %259 = vmatprep.subr.mxu0 0.0
    %260 = vmatpush1.msra.mxu0 %v137
    %261 = vmatprep.subr.mxu0 0.0
    %262 = vmatpush1.msra.mxu0 %v138
    %263 = vmatprep.subr.mxu0 0.0
    %264 = vmatpush1.msra.mxu0 %v139
    %265 = vmatprep.subr.mxu0 0.0
    %266 = vmatpush1.msra.mxu0 %v140
    %267 = vmatprep.subr.mxu0 0.0
    %268 = vmatpush1.msra.mxu0 %v249
    %269 = vmatprep.subr.mxu0 0.0
    %270 = vmatpush1.msra.mxu0 0.0
    %271 = vmatprep.subr.mxu0 0.0
    %272 = vmatpush1.msra.mxu0 0.0
    %273 = vmatprep.subr.mxu0 0.0
    %274 = vmatpush1.msra.mxu0 0.0
    %275 = vmatprep.subr.mxu0 0.0
    %276 = vmatpush1.msra.mxu0 0.0
    %277 = vmatprep.subr.mxu0 0.0
    %278 = vmatpush1.msra.mxu0 0.0
    %279 = vmatprep.subr.mxu0 0.0
    %280 = vmatpush1.msra.mxu0 0.0
    %281 = vmatprep.subr.mxu0 0.0
    %282 = vmatpush1.msra.mxu0 0.0
    %283 = vmatprep.subr.mxu0 0.0
    %284 = vmatpush1.msra.mxu0 0.0
    %285 = vmatprep.subr.mxu0 0.0
    %286 = vmatpush1.msra.mxu0 0.0
    %287 = vmatprep.subr.mxu0 0.0
    %288 = vmatpush1.msra.mxu0 0.0
    %289 = vmatprep.subr.mxu0 0.0
    %290 = vmatpush1.msra.mxu0 0.0
    %291 = vmatprep.subr.mxu0 0.0
    %292 = vmatpush1.msra.mxu0 0.0
    %293 = vmatprep.subr.mxu0 0.0
    %294 = vmatpush1.msra.mxu0 0.0
    %295 = vmatprep.subr.mxu0 0.0
    %296 = vmatpush1.msra.mxu0 0.0
    %297 = vmatprep.subr.mxu0 0.0
    %298 = vmatpush1.msra.mxu0 0.0
    %299 = vmatprep.subr.mxu0 0.0
    %300 = vmatpush1.msra.mxu0 0.0
    %301 = vmatprep.subr.mxu0 0.0
    %302 = vmatpush1.msra.mxu0 0.0
    %303 = vmatprep.subr.mxu0 0.0
    %304 = vmatpush1.msra.mxu0 0.0
    %305 = vmatprep.subr.mxu0 0.0
    %306 = vmatpush1.msra.mxu0 0.0
    %307 = vmatprep.subr.mxu0 0.0
    %308 = vmatpush1.msra.mxu0 0.0
    %309 = vmatprep.subr.mxu0 0.0
    %310 = vmatpush1.msra.mxu0 0.0
    %311 = vmatprep.subr.mxu0 0.0
    %312 = vmatpush1.msra.mxu0 0.0
    %313 = vmatprep.subr.mxu0 0.0
    %314 = vmatpush1.msra.mxu0 0.0
    %315 = vmatprep.mubr.f32.mxu0 0.0
    %316 = vmatmul.mubr.f32.gmra.mrb[0].mxu0 %v230
    %v317 = vpop.f32.mrb[0].mxu0
    %v318 = vadd.f32 0.0, %v317
    %v319 = vpop.f32.mrb[0].mxu0
    %320 = vmatprep.mubr.f32.mxu0 0.0
    %321 = vmatmul.mubr.f32.gmra.mrb[0].mxu0 %v233
    %v322 = vpop.f32.mrb[0].mxu0
    %v323 = vadd.f32 0.0, %v322
    %v324 = vpop.f32.mrb[0].mxu0
    %325 = vmatprep.mubr.f32.mxu0 0.0
    %326 = vmatmul.mubr.f32.gmra.mrb[0].mxu0 %v236
    %v327 = vpop.f32.mrb[0].mxu0
    %v328 = vadd.f32 0.0, %v327
    %v329 = vpop.f32.mrb[0].mxu0
    %330 = vmatprep.mubr.f32.mxu0 0.0
    %331 = vmatmul.mubr.f32.gmra.mrb[0].mxu0 %v239
    %v332 = vpop.f32.mrb[0].mxu0
    %v333 = vadd.f32 0.0, %v332
    %v334 = vpop.f32.mrb[0].mxu0
    %335 = vmatprep.mubr.f32.mxu0 0.0
    %336 = vmatmul.mubr.f32.gmra.mrb[0].mxu0 %v242
    %v337 = vpop.f32.mrb[0].mxu0
    %v338 = vadd.f32 0.0, %v337
    %v339 = vpop.f32.mrb[0].mxu0
    %340 = vmatprep.mubr.f32.mxu0 0.0
    %341 = vmatmul.mubr.f32.gmra.mrb[0].mxu0 %v245
    %v342 = vpop.f32.mrb[0].mxu0
    %v343 = vadd.f32 0.0, %v342
    %v344 = vpop.f32.mrb[0].mxu0
    %345 = vdwg.mxu0
    %v346 = vadd.f32 %v222, %v318
    %v347 = vadd.f32 %v223, %v323
    %v348 = vadd.f32 %v224, %v328
    %v349 = vadd.f32 %v225, %v333
    %v350 = vadd.f32 %v226, %v338
    %v351 = vadd.f32 %v227, %v343
    %v352 = vld [vmem:[#allocation10] sm:$0xff]
    %v353 = vld [vmem:[#allocation10 + $0x8] sm:$0xff]
    %v354 = vld [vmem:[#allocation10 + $0x10] sm:$0xff]
    %v355 = vld [vmem:[#allocation10 + $0x18] sm:$0xff]
    %v356 = vld [vmem:[#allocation10 + $0x20] sm:$0xff]
    %v357 = vld [vmem:[#allocation10 + $0x28] sm:$0xff]
    %v358 = vld [vmem:[#allocation10 + $0x30] sm:$0xff]
    %v359 = vld [vmem:[#allocation10 + $0x38] sm:$0xff]
    %v360 = vld [vmem:[#allocation10 + $0x40] sm:$0xff]
    %v361 = vld [vmem:[#allocation10 + $0x48] sm:$0xff]
    %v362 = vld [vmem:[#allocation10 + $0x50] sm:$0xff]
    %v363 = vld [vmem:[#allocation10 + $0x58] sm:$0xff]
    %v364 = vld [vmem:[#allocation10 + $0x60] sm:$0xff]
    %v365 = vld [vmem:[#allocation10 + $0x68] sm:$0xff]
    %v366 = vld [vmem:[#allocation10 + $0x70] sm:$0xff]
    %v367 = vld [vmem:[#allocation10 + $0x78] sm:$0xff]
    %v368 = vld [vmem:[#allocation10 + $0x80] sm:$0xff]
    %v369 = vld [vmem:[#allocation10 + $0x88] sm:$0xff]
    %v370 = vld [vmem:[#allocation10 + $0x90] sm:$0xff]
    %v371 = vld [vmem:[#allocation10 + $0x98] sm:$0xff]
    %v372 = vld [vmem:[#allocation10 + $0xa0] sm:$0xff]
    %v373 = vld [vmem:[#allocation10 + $0xa8] sm:$0xff]
    %v374 = vld [vmem:[#allocation10 + $0xb0] sm:$0xff]
    %v375 = vld [vmem:[#allocation10 + $0xb8] sm:$0xff]
    %v376 = vld [vmem:[#allocation10 + $0xc0] sm:$0xff]
    %v377 = vld [vmem:[#allocation10 + $0xc8] sm:$0xff]
    %v378 = vld [vmem:[#allocation10 + $0xd0] sm:$0xff]
    %v379 = vld [vmem:[#allocation10 + $0xd8] sm:$0xff]
    %v380 = vld [vmem:[#allocation10 + $0xe0] sm:$0xff]
    %v381 = vld [vmem:[#allocation10 + $0xe8] sm:$0xff]
    %v382 = vld [vmem:[#allocation10 + $0xf0] sm:$0xff]
    %v383 = vld [vmem:[#allocation10 + $0xf8] sm:$0xff]
    %v384 = vld [vmem:[#allocation11] sm:$0x3]
    %v386 = vlaneseq
    %v387 = vshrl.u32 %v386, 7
    %v388 = vsub.s32 0, %v387
    %v389 = vrot.slane %v384, %v388
    %v390 = vlaneseq
    %v391 = vshrl.u32 %v390, 7
    %v392 = vsub.s32 1, %v391
    %v393 = vrot.slane %v384, %v392
    %396 = vmatprep.subr.mxu0 %v353
    %397 = vmatpush1.msra.mxu0 %v352
    %398 = vmatprep.subr.mxu0 %v355
    %399 = vmatpush1.msra.mxu0 %v354
    %400 = vmatprep.subr.mxu0 %v357
    %401 = vmatpush1.msra.mxu0 %v356
    %402 = vmatprep.subr.mxu0 %v359
    %403 = vmatpush1.msra.mxu0 %v358
    %404 = vmatprep.subr.mxu0 %v361
    %405 = vmatpush1.msra.mxu0 %v360
    %406 = vmatprep.subr.mxu0 %v363
    %407 = vmatpush1.msra.mxu0 %v362
    %408 = vmatprep.subr.mxu0 %v365
    %409 = vmatpush1.msra.mxu0 %v364
    %410 = vmatprep.subr.mxu0 %v367
    %411 = vmatpush1.msra.mxu0 %v366
    %412 = vmatprep.subr.mxu0 %v369
    %413 = vmatpush1.msra.mxu0 %v368
    %414 = vmatprep.subr.mxu0 %v371
    %415 = vmatpush1.msra.mxu0 %v370
    %416 = vmatprep.subr.mxu0 %v373
    %417 = vmatpush1.msra.mxu0 %v372
    %418 = vmatprep.subr.mxu0 %v375
    %419 = vmatpush1.msra.mxu0 %v374
    %420 = vmatprep.subr.mxu0 %v377
    %421 = vmatpush1.msra.mxu0 %v376
    %422 = vmatprep.subr.mxu0 %v379
    %423 = vmatpush1.msra.mxu0 %v378
    %424 = vmatprep.subr.mxu0 %v381
    %425 = vmatpush1.msra.mxu0 %v380
    %426 = vmatprep.subr.mxu0 %v383
    %427 = vmatpush1.msra.mxu0 %v382
    %428 = vmatprep.subr.mxu0 0.0
    %429 = vmatpush1.msra.mxu0 0.0
    %430 = vmatprep.subr.mxu0 0.0
    %431 = vmatpush1.msra.mxu0 0.0
    %432 = vmatprep.subr.mxu0 0.0
    %433 = vmatpush1.msra.mxu0 0.0
    %434 = vmatprep.subr.mxu0 0.0
    %435 = vmatpush1.msra.mxu0 0.0
    %436 = vmatprep.subr.mxu0 0.0
    %437 = vmatpush1.msra.mxu0 0.0
    %438 = vmatprep.subr.mxu0 0.0
    %439 = vmatpush1.msra.mxu0 0.0
    %440 = vmatprep.subr.mxu0 0.0
    %441 = vmatpush1.msra.mxu0 0.0
    %442 = vmatprep.subr.mxu0 0.0
    %443 = vmatpush1.msra.mxu0 0.0
    %444 = vmatprep.subr.mxu0 0.0
    %445 = vmatpush1.msra.mxu0 0.0
    %446 = vmatprep.subr.mxu0 0.0
    %447 = vmatpush1.msra.mxu0 0.0
    %448 = vmatprep.subr.mxu0 0.0
    %449 = vmatpush1.msra.mxu0 0.0
    %450 = vmatprep.subr.mxu0 0.0
    %451 = vmatpush1.msra.mxu0 0.0
    %452 = vmatprep.subr.mxu0 0.0
    %453 = vmatpush1.msra.mxu0 0.0
    %454 = vmatprep.subr.mxu0 0.0
    %455 = vmatpush1.msra.mxu0 0.0
    %456 = vmatprep.subr.mxu0 0.0
    %457 = vmatpush1.msra.mxu0 0.0
    %458 = vmatprep.subr.mxu0 0.0
    %459 = vmatpush1.msra.mxu0 0.0
    %460 = vmatprep.mubr.f32.mxu0 0.0
    %461 = vmatmul.mubr.f32.gmra.mrb[0].mxu0 %v346
    %v462 = vpop.f32.mrb[0].mxu0
    %v463 = vadd.f32 %v389, %v462
    %v464 = vpop.f32.mrb[0].mxu0
    %v465 = vadd.f32 %v393, %v464
    %466 = vmatprep.mubr.f32.mxu0 0.0
    %467 = vmatmul.mubr.f32.gmra.mrb[0].mxu0 %v347
    %v468 = vpop.f32.mrb[0].mxu0
    %v469 = vadd.f32 %v389, %v468
    %v470 = vpop.f32.mrb[0].mxu0
    %v471 = vadd.f32 %v393, %v470
    %472 = vmatprep.mubr.f32.mxu0 0.0
    %473 = vmatmul.mubr.f32.gmra.mrb[0].mxu0 %v348
    %v474 = vpop.f32.mrb[0].mxu0
    %v475 = vadd.f32 %v389, %v474
    %v476 = vpop.f32.mrb[0].mxu0
    %v477 = vadd.f32 %v393, %v476
    %478 = vmatprep.mubr.f32.mxu0 0.0
    %479 = vmatmul.mubr.f32.gmra.mrb[0].mxu0 %v349
    %v480 = vpop.f32.mrb[0].mxu0
    %v481 = vadd.f32 %v389, %v480
    %v482 = vpop.f32.mrb[0].mxu0
    %v483 = vadd.f32 %v393, %v482
    %484 = vmatprep.mubr.f32.mxu0 0.0
    %485 = vmatmul.mubr.f32.gmra.mrb[0].mxu0 %v350
    %v486 = vpop.f32.mrb[0].mxu0
    %v487 = vadd.f32 %v389, %v486
    %v488 = vpop.f32.mrb[0].mxu0
    %v489 = vadd.f32 %v393, %v488
    %490 = vmatprep.mubr.f32.mxu0 0.0
    %491 = vmatmul.mubr.f32.gmra.mrb[0].mxu0 %v351
    %v492 = vpop.f32.mrb[0].mxu0
    %v493 = vadd.f32 %v389, %v492
    %v494 = vpop.f32.mrb[0].mxu0
    %v495 = vadd.f32 %v393, %v494
    %496 = vdwg.mxu0
    %v497 = vadd.f32 %v463, %v465
    %498 = vadd.xlane.f32.xlu0 %v497
    %v499 = vpop.xlane.xlu0 %498
    %v500 = vadd.f32 %v469, %v471
    %501 = vadd.xlane.f32.xlu0 %v500
    %v502 = vpop.xlane.xlu0 %501
    %v503 = vadd.f32 %v475, %v477
    %504 = vadd.xlane.f32.xlu0 %v503
    %v505 = vpop.xlane.xlu0 %504
    %v506 = vadd.f32 %v481, %v483
    %507 = vadd.xlane.f32.xlu0 %v506
    %v508 = vpop.xlane.xlu0 %507
    %v509 = vadd.f32 %v487, %v489
    %510 = vadd.xlane.f32.xlu0 %v509
    %v511 = vpop.xlane.xlu0 %510
    %v512 = vadd.f32 %v493, %v495
    %513 = vadd.xlane.f32.xlu0 %v512
    %v514 = vpop.xlane.xlu0 %513
    %v515 = vrcp.pop 256.0
    %v516 = vmul.f32 %v499, %v515
    %v517 = vmul.f32 %v502, %v515
    %v518 = vmul.f32 %v505, %v515
    %v519 = vmul.f32 %v508, %v515
    %v520 = vmul.f32 %v511, %v515
    %v521 = vmul.f32 %v514, %v515
    %v522 = vsub.f32 %v463, %v516
    %v523 = vsub.f32 %v465, %v516
    %v524 = vsub.f32 %v469, %v517
    %v525 = vsub.f32 %v471, %v517
    %v526 = vsub.f32 %v475, %v518
    %v527 = vsub.f32 %v477, %v518
    %v528 = vsub.f32 %v481, %v519
    %v529 = vsub.f32 %v483, %v519
    %v530 = vsub.f32 %v487, %v520
    %v531 = vsub.f32 %v489, %v520
    %v532 = vsub.f32 %v493, %v521
    %v533 = vsub.f32 %v495, %v521
    %v534 = vmul.f32 %v522, %v522
    %v535 = vmul.f32 %v523, %v523
    %v536 = vmul.f32 %v524, %v524
    %v537 = vmul.f32 %v525, %v525
    %v538 = vmul.f32 %v526, %v526
    %v539 = vmul.f32 %v527, %v527
    %v540 = vmul.f32 %v528, %v528
    %v541 = vmul.f32 %v529, %v529
    %v542 = vmul.f32 %v530, %v530
    %v543 = vmul.f32 %v531, %v531
    %v544 = vmul.f32 %v532, %v532
    %v545 = vmul.f32 %v533, %v533
    %v546 = vadd.f32 %v534, %v535
    %547 = vadd.xlane.f32.xlu0 %v546
    %v548 = vpop.xlane.xlu0 %547
    %v549 = vadd.f32 %v536, %v537
    %550 = vadd.xlane.f32.xlu0 %v549
    %v551 = vpop.xlane.xlu0 %550
    %v552 = vadd.f32 %v538, %v539
    %553 = vadd.xlane.f32.xlu0 %v552
    %v554 = vpop.xlane.xlu0 %553
    %v555 = vadd.f32 %v540, %v541
    %556 = vadd.xlane.f32.xlu0 %v555
    %v557 = vpop.xlane.xlu0 %556
    %v558 = vadd.f32 %v542, %v543
    %559 = vadd.xlane.f32.xlu0 %v558
    %v560 = vpop.xlane.xlu0 %559
    %v561 = vadd.f32 %v544, %v545
    %562 = vadd.xlane.f32.xlu0 %v561
    %v563 = vpop.xlane.xlu0 %562
    %v564 = vmul.f32 %v548, %v515
    %v565 = vmul.f32 %v551, %v515
    %v566 = vmul.f32 %v554, %v515
    %v567 = vmul.f32 %v557, %v515
    %v568 = vmul.f32 %v560, %v515
    %v569 = vmul.f32 %v563, %v515
    %v570 = vadd.f32 %v564, 1e-05
    %v571 = vadd.f32 %v565, 1e-05
    %v572 = vadd.f32 %v566, 1e-05
    %v573 = vadd.f32 %v567, 1e-05
    %v574 = vadd.f32 %v568, 1e-05
    %v575 = vadd.f32 %v569, 1e-05
    %v576 = vrsqrt.pop %v570
    %v577 = vrsqrt.pop %v571
    %v578 = vrsqrt.pop %v572
    %v579 = vrsqrt.pop %v573
    %v580 = vrsqrt.pop %v574
    %v581 = vrsqrt.pop %v575
    %v582 = vmul.f32 %v522, %v576
    %v583 = vmul.f32 %v523, %v576
    %v584 = vmul.f32 %v524, %v577
    %v585 = vmul.f32 %v525, %v577
    %v586 = vmul.f32 %v526, %v578
    %v587 = vmul.f32 %v527, %v578
    %v588 = vmul.f32 %v528, %v579
    %v589 = vmul.f32 %v529, %v579
    %v590 = vmul.f32 %v530, %v580
    %v591 = vmul.f32 %v531, %v580
    %v592 = vmul.f32 %v532, %v581
    %v593 = vmul.f32 %v533, %v581
    %v594 = vld [vmem:[#allocation13] sm:$0x3]
    %v596 = vlaneseq
    %v597 = vshrl.u32 %v596, 7
    %v598 = vsub.s32 0, %v597
    %v599 = vrot.slane %v594, %v598
    %v600 = vlaneseq
    %v601 = vshrl.u32 %v600, 7
    %v602 = vsub.s32 1, %v601
    %v603 = vrot.slane %v594, %v602
    %v606 = vmul.f32 %v582, %v599
    %v607 = vmul.f32 %v583, %v603
    %v608 = vmul.f32 %v584, %v599
    %v609 = vmul.f32 %v585, %v603
    %v610 = vmul.f32 %v586, %v599
    %v611 = vmul.f32 %v587, %v603
    %v612 = vmul.f32 %v588, %v599
    %v613 = vmul.f32 %v589, %v603
    %v614 = vmul.f32 %v590, %v599
    %v615 = vmul.f32 %v591, %v603
    %v616 = vmul.f32 %v592, %v599
    %v617 = vmul.f32 %v593, %v603
    %v618 = vld [vmem:[#allocation14] sm:$0x3]
    %v620 = vlaneseq
    %v621 = vshrl.u32 %v620, 7
    %v622 = vsub.s32 0, %v621
    %v623 = vrot.slane %v618, %v622
    %v624 = vlaneseq
    %v625 = vshrl.u32 %v624, 7
    %v626 = vsub.s32 1, %v625
    %v627 = vrot.slane %v618, %v626
    %v630 = vadd.f32 %v606, %v623
    %v631 = vadd.f32 %v607, %v627
    %v632 = vadd.f32 %v608, %v623
    %v633 = vadd.f32 %v609, %v627
    %v634 = vadd.f32 %v610, %v623
    %v635 = vadd.f32 %v611, %v627
    %v636 = vadd.f32 %v612, %v623
    %v637 = vadd.f32 %v613, %v627
    %v638 = vadd.f32 %v614, %v623
    %v639 = vadd.f32 %v615, %v627
    %v640 = vadd.f32 %v616, %v623
    %v641 = vadd.f32 %v617, %v627
    %642 = vst [vmem:[#allocation16] sm:$0xff] %v630
    %643 = vst [vmem:[#allocation16 + $0x8] sm:$0xff] %v631
    %644 = vst [vmem:[#allocation16 + $0x10] sm:$0xff] %v632
    %645 = vst [vmem:[#allocation16 + $0x18] sm:$0xff] %v633
    %646 = vst [vmem:[#allocation16 + $0x20] sm:$0xff] %v634
    %647 = vst [vmem:[#allocation16 + $0x28] sm:$0xff] %v635
    %648 = vst [vmem:[#allocation16 + $0x30] sm:$0xff] %v636
    %649 = vst [vmem:[#allocation16 + $0x38] sm:$0xff] %v637
    %650 = vst [vmem:[#allocation16 + $0x40] sm:$0xff] %v638
    %651 = vst [vmem:[#allocation16 + $0x48] sm:$0xff] %v639
    %652 = vst [vmem:[#allocation16 + $0x50] sm:$0xff] %v640
    %653 = vst [vmem:[#allocation16 + $0x58] sm:$0xff] %v641
    // Predicated region
    $region66: #{tpu_custom_call.1} parent=1 // pred_check
      _
    $region67: #{tpu_custom_call.1} parent=1 // pred_check_branch
      %655 = sbr.rel (0) target = $region69
    $region68: #{tpu_custom_call.1} parent=1 // pred_region
      %s657 = ssub.s32 1536, 1536
      %658 = vsyncadd [#allocation4], %s657
      %s659 = sshll.u32 [#allocation16], 4
      %s660 = int_to_ptr.vmem [resolvable:$true] %s659
      %665 = dma.vmem_to_hbm [thread:$0]  %s660, 1536, %s8, [#allocation4], 256, 256, 16
    $region69: #{tpu_custom_call.1} parent=1 // pred_fallthru
      _
    // Predicated region
    $region70: #{tpu_custom_call.1} parent=1 // pred_check
      _
    $region71: #{tpu_custom_call.1} parent=1 // pred_check_branch
      %667 = sbr.rel (0) target = $region73
    $region72: #{tpu_custom_call.1} parent=1 // pred_region
      %668 = dma.done [#allocation4], 1536
    $region73: #{tpu_custom_call.1} parent=1 // pred_fallthru
      _
    %669 = vsyncpa [#allocation3], 1
    %670 = vsyncpa [#allocation6], 1
    %671 = vsyncpa [#allocation9], 1
    %672 = vsyncpa [#allocation12], 1
    %673 = vsyncpa [#allocation15], 1
    %674 = vsyncpa [#allocation4], 1

</llo_original>
